<compile_context>
chip_gen: v6e
topology: v6e:2x2x1
jax: 0.10.0
libtpu: 0.0.40
codegen_flags: <defaults>
</compile_context>

<pallas_src>
import jax
import jax.numpy as jnp
from jax.experimental import pallas as pl
from jax.experimental.pallas import tpu as pltpu


def _linear_kernel(x_ref, w_ref, b_ref, o_ref):
    # x_ref: (TB, K), w_ref: (K, N), b_ref: (1, N), o_ref: (TB, N).
    # MXU matmul with f32 accumulation, f32 bias epilogue on the VPU.
    acc = jnp.dot(x_ref[...], w_ref[...], preferred_element_type=jnp.float32)
    o_ref[...] = (acc + b_ref[...]).astype(o_ref.dtype)


def prepare_params(weight, bias, compute_dtype=jnp.float32):
    """Hoist the (10, 784) -> (784, 10) transpose / cast out of the per-call path."""
    w_t = jnp.asarray(weight).T.astype(compute_dtype)       # (K, N)
    b2 = jnp.asarray(bias, jnp.float32).reshape(1, -1)      # (1, N), f32 bias epilogue
    return w_t, b2


def _dim_semantics():
    # Only CORE_PARALLEL actually shards a grid axis across TensorCores; it matters only
    # on v7x (2 TCs/chip).  Plain PARALLEL elsewhere.
    kind = jax.devices()[0].device_kind.lower()
    if "v7" in kind:
        return (pltpu.CORE_PARALLEL,)
    return (pltpu.PARALLEL,)


def mnist_logistic_forward(x, w_t, b2, *, block_b=2048):
    """Forward of nn.Linear(784, 10): x @ weight.T + bias.

    x:   (B, 784)  f32 or bf16 (bf16 only pays off if x already lives in HBM as bf16;
                    the wrapper never casts the x stream).
    w_t: (784, 10) pre-transposed weight from prepare_params.
    b2:  (1, 10)   f32 bias from prepare_params.
    Returns (B, 10) float32.
    """
    B, K = x.shape
    Kw, N = w_t.shape
    assert K == Kw, (K, Kw)

    # Matmul operands share x's dtype; only the tiny weight is cast (no-op on the f32 path).
    w_in = w_t if w_t.dtype == x.dtype else w_t.astype(x.dtype)

    tb = min(block_b, max(8, ((B + 7) // 8) * 8))   # sublane-aligned tile height
    num_tiles = pl.cdiv(B, tb)                      # last tile may be partial; Pallas crops it

    bytes_accessed = (x.size * x.dtype.itemsize
                      + w_in.size * w_in.dtype.itemsize
                      + b2.size * b2.dtype.itemsize
                      + B * N * 4)
    cost = pl.CostEstimate(flops=2 * B * K * N, transcendentals=0,
                           bytes_accessed=bytes_accessed)

    return pl.pallas_call(
        _linear_kernel,
        out_shape=jax.ShapeDtypeStruct((B, N), jnp.float32),
        grid_spec=pltpu.PrefetchScalarGridSpec(
            num_scalar_prefetch=0,
            grid=(num_tiles,),
            in_specs=[
                pl.BlockSpec((tb, K), lambda i: (i, 0)),   # x tile streams with the grid
                pl.BlockSpec((K, N), lambda i: (0, 0)),    # weight stays VMEM-resident
                pl.BlockSpec((1, N), lambda i: (0, 0)),    # bias stays VMEM-resident
            ],
            out_specs=pl.BlockSpec((tb, N), lambda i: (i, 0)),
        ),
        compiler_params=pltpu.CompilerParams(
            dimension_semantics=_dim_semantics(),
            vmem_limit_bytes=32 * 1024 * 1024,   # explicit, v7x-safe scoped cap
        ),
        cost_estimate=cost,
    )(x, w_in, b2)


if __name__ == "__main__":
    key = jax.random.PRNGKey(0)
    kx, kw, kb, kx2 = jax.random.split(key, 4)

    K, N = 784, 10
    # PyTorch Linear default init: U(-1/sqrt(K), 1/sqrt(K))
    bound = 1.0 / (K ** 0.5)
    weight = jax.random.uniform(kw, (N, K), jnp.float32, -bound, bound)   # (10, 784)
    bias = jax.random.uniform(kb, (N,), jnp.float32, -bound, bound)       # (10,)

    w_t, b2 = prepare_params(weight, bias)   # hoisted once, reused across calls

    # 1) Small batch, single tile, f32 path.
    B = 16
    x = jax.random.normal(kx, (B, K), jnp.float32)
    out = jax.block_until_ready(mnist_logistic_forward(x, w_t, b2))
    ref = x @ weight.T + bias
    assert out.shape == (B, N)
    assert jnp.allclose(out, ref, atol=1e-4, rtol=1e-4), "f32 mismatch vs reference"

    # 2) Ragged batch: partial last tile handled by Pallas (no wrapper-side pad), f32.
    B2 = 200
    x2 = jax.random.normal(kx2, (B2, K), jnp.float32)
    out2 = jax.block_until_ready(mnist_logistic_forward(x2, w_t, b2, block_b=64))
    ref2 = x2 @ weight.T + bias
    assert out2.shape == (B2, N)
    assert jnp.allclose(out2, ref2, atol=1e-4, rtol=1e-4), "ragged f32 mismatch vs reference"

    # 3) bf16 path: only taken because x already arrives as bf16 (no wrapper cast of x).
    x3 = x2.astype(jnp.bfloat16)
    out3 = jax.block_until_ready(mnist_logistic_forward(x3, w_t, b2, block_b=64))
    ref3 = (x3.astype(jnp.float32)
            @ weight.T.astype(jnp.bfloat16).astype(jnp.float32)) + bias
    assert out3.shape == (B2, N)
    assert jnp.allclose(out3, ref3, atol=5e-2, rtol=5e-2), "bf16 mismatch vs reference"

    print("KERNEL_OK")
</pallas_src>

<mosaic_0001>
module attributes {stable_mosaic.version = 11 : i64} {
  func.func @_linear_kernel(%arg0: i32, %arg1: memref<16x784xf32, #tpu.memory_space<vmem>>, %arg2: memref<784x10xf32, #tpu.memory_space<vmem>>, %arg3: memref<1x10xf32, #tpu.memory_space<vmem>>, %arg4: memref<16x10xf32, #tpu.memory_space<vmem>>) attributes {dimension_semantics = [#tpu.dimension_semantics<parallel>], iteration_bounds = array<i64: 1>, scalar_prefetch = 0 : i64, scratch_operands = 0 : i64, tpu.core_type = #tpu.core_type<tc>, window_params = [{transform_indices = @transform_0, window_bounds = array<i64: 16, 784>}, {pipeline_mode = #tpu.pipeline_mode<synchronous>, transform_indices = @transform_1, window_bounds = array<i64: 784, 10>}, {pipeline_mode = #tpu.pipeline_mode<synchronous>, transform_indices = @transform_2, window_bounds = array<i64: 1, 10>}, {transform_indices = @transform_3, window_bounds = array<i64: 16, 10>}]} {
    %c0 = arith.constant 0 : index
    %c0_0 = arith.constant 0 : index
    %0 = vector.load %arg1[%c0, %c0_0] : memref<16x784xf32, #tpu.memory_space<vmem>>, vector<16x784xf32>
    %c0_1 = arith.constant 0 : index
    %c0_2 = arith.constant 0 : index
    %1 = vector.load %arg2[%c0_1, %c0_2] : memref<784x10xf32, #tpu.memory_space<vmem>>, vector<784x10xf32>
    %cst = arith.constant dense<0.000000e+00> : vector<16x10xf32>
    %2 = tpu.matmul %0, %1, %cst {dimension_numbers = #tpu.dot_dimension_numbers<[1], [0], [0], [1], [0, 0, 1, 1], [], []>} : vector<16x784xf32>, vector<784x10xf32>, vector<16x10xf32> -> vector<16x10xf32>
    %c0_3 = arith.constant 0 : index
    %c0_4 = arith.constant 0 : index
    %3 = vector.load %arg3[%c0_3, %c0_4] : memref<1x10xf32, #tpu.memory_space<vmem>>, vector<1x10xf32>
    %4 = vector.broadcast %3 : vector<1x10xf32> to vector<16x10xf32>
    %5 = arith.addf %2, %4 : vector<16x10xf32>
    %c0_5 = arith.constant 0 : index
    %c0_6 = arith.constant 0 : index
    %6 = vector.load %arg4[%c0_5, %c0_6] : memref<16x10xf32, #tpu.memory_space<vmem>>, vector<16x10xf32>
    tpu.vector_store %arg4[%c0_5, %c0_6], %5 {strides = array<i32>} : memref<16x10xf32, #tpu.memory_space<vmem>>, vector<16x10xf32>,
    return
  }
  func.func @transform_0(%arg0: i32) -> (i32, i32) {
    %c0_i32 = arith.constant 0 : i32
    %c0_i32_0 = arith.constant 0 : i32
    return %arg0, %c0_i32 : i32, i32
  }
  func.func @transform_1(%arg0: i32) -> (i32, i32) {
    %c0_i32 = arith.constant 0 : i32
    %c0_i32_0 = arith.constant 0 : i32
    %c0_i32_1 = arith.constant 0 : i32
    return %c0_i32, %c0_i32_0 : i32, i32
  }
  func.func @transform_2(%arg0: i32) -> (i32, i32) {
    %c0_i32 = arith.constant 0 : i32
    %c0_i32_0 = arith.constant 0 : i32
    %c0_i32_1 = arith.constant 0 : i32
    return %c0_i32, %c0_i32_0 : i32, i32
  }
  func.func @transform_3(%arg0: i32) -> (i32, i32) {
    %c0_i32 = arith.constant 0 : i32
    %c0_i32_0 = arith.constant 0 : i32
    return %arg0, %c0_i32 : i32, i32
  }
}

</mosaic_0001>

<llo_original>
// kernel: tpu_custom_call.1
$region0: #{tpu_custom_call.1}
  #allocation0 [shape = 'u32[]', space=smem, size = 0x4, offset = 0x4, fixed_abs, tag = 'smem constant byte address 0x4 - core index']
  #allocation1 [shape = 'u32[144,128]{1,0:T(1,128)}', space=vmem, size = 0x12000, scoped, tag = 'internal scratch']
  %s0 = inlined_call_operand.vmem [shape: f32[16,784], index: 0, kind: input, shape index: {}]
  %s1 = inlined_call_operand.vmem [shape: f32[784,10], index: 1, kind: input, shape index: {}]
  %s2 = inlined_call_operand.vmem [shape: f32[1,10], index: 2, kind: input, shape index: {}]
  %s3 = inlined_call_operand.hbm [shape: f32[16,10], index: 3, kind: output, shape index: {}]
  %s4 = sld [smem:[#allocation0]]
  $region22: #{tpu_custom_call.1} parent=0
    _
  %s6 = ssub.s32 1, %s4
  %s7 = scalar_select 0, %s6, %s4
  $region1: #{tpu_custom_call.1} parent=0
    #allocation2 [shape = 'u8[8192]{0}', space=vmem, size = 0x2000, scoped, tag = 'output window, operand 0, single buffered']
    #allocation3 [shape = 's32[1]{0}', space=sflag, size = 0x4, scoped, tag = 'scoped memory for tpu_custom_call.1']
    %8 = vsyncpa [#allocation3], 0
    // Predicated region
    $region2: #{tpu_custom_call.1} parent=1 // pred_check
      _
    $region3: #{tpu_custom_call.1} parent=1 // pred_check_branch
      %10 = sbr.rel (0) target = $region5
    $region4: #{tpu_custom_call.1} parent=1 // pred_region
      _
    $region5: #{tpu_custom_call.1} parent=1 // pred_fallthru
      _
    // Predicated region
    $region6: #{tpu_custom_call.1} parent=1 // pred_check
      _
    $region7: #{tpu_custom_call.1} parent=1 // pred_check_branch
      %12 = sbr.rel (0) target = $region9
    $region8: #{tpu_custom_call.1} parent=1 // pred_region
      _
    $region9: #{tpu_custom_call.1} parent=1 // pred_fallthru
      _
    // Predicated region
    $region10: #{tpu_custom_call.1} parent=1 // pred_check
      _
    $region11: #{tpu_custom_call.1} parent=1 // pred_check_branch
      %14 = sbr.rel (0) target = $region13
    $region12: #{tpu_custom_call.1} parent=1 // pred_region
      _
    $region13: #{tpu_custom_call.1} parent=1 // pred_fallthru
      _
    %v15 = vld [vmem:[%s0] sm:$0xff]
    %v16 = vld [vmem:[%s0 + $0x8] sm:$0xff]
    %v17 = vld [vmem:[%s0 + $0x10] sm:$0xff]
    %v18 = vld [vmem:[%s0 + $0x18] sm:$0xff]
    %v19 = vld [vmem:[%s0 + $0x20] sm:$0xff]
    %v20 = vld [vmem:[%s0 + $0x28] sm:$0xff]
    %v21 = vld [vmem:[%s0 + $0x30] sm:$0xff]
    %v22 = vld [vmem:[%s0 + $0x38] sm:$0xff]
    %v23 = vld [vmem:[%s0 + $0x40] sm:$0xff]
    %v24 = vld [vmem:[%s0 + $0x48] sm:$0xff]
    %v25 = vld [vmem:[%s0 + $0x50] sm:$0xff]
    %v26 = vld [vmem:[%s0 + $0x58] sm:$0xff]
    %v27 = vld [vmem:[%s0 + $0x60] sm:$0xff]
    %v28 = vld [vmem:[%s0 + $0x68] sm:$0xff]
    %v29 = vld [vmem:[%s1] sm:$0xff]
    %v30 = vld [vmem:[%s1 + $0x8] sm:$0xff]
    %v31 = vld [vmem:[%s1 + $0x10] sm:$0xff]
    %v32 = vld [vmem:[%s1 + $0x18] sm:$0xff]
    %v33 = vld [vmem:[%s1 + $0x20] sm:$0xff]
    %v34 = vld [vmem:[%s1 + $0x28] sm:$0xff]
    %v35 = vld [vmem:[%s1 + $0x30] sm:$0xff]
    %v36 = vld [vmem:[%s1 + $0x38] sm:$0xff]
    %v37 = vld [vmem:[%s1 + $0x40] sm:$0xff]
    %v38 = vld [vmem:[%s1 + $0x48] sm:$0xff]
    %v39 = vld [vmem:[%s1 + $0x50] sm:$0xff]
    %v40 = vld [vmem:[%s1 + $0x58] sm:$0xff]
    %v41 = vld [vmem:[%s1 + $0x60] sm:$0xff]
    %v42 = vld [vmem:[%s1 + $0x68] sm:$0xff]
    %v43 = vld [vmem:[%s1 + $0x70] sm:$0xff]
    %v44 = vld [vmem:[%s1 + $0x78] sm:$0xff]
    %v45 = vld [vmem:[%s1 + $0x80] sm:$0xff]
    %v46 = vld [vmem:[%s1 + $0x88] sm:$0xff]
    %v47 = vld [vmem:[%s1 + $0x90] sm:$0xff]
    %v48 = vld [vmem:[%s1 + $0x98] sm:$0xff]
    %v49 = vld [vmem:[%s1 + $0xa0] sm:$0xff]
    %v50 = vld [vmem:[%s1 + $0xa8] sm:$0xff]
    %v51 = vld [vmem:[%s1 + $0xb0] sm:$0xff]
    %v52 = vld [vmem:[%s1 + $0xb8] sm:$0xff]
    %v53 = vld [vmem:[%s1 + $0xc0] sm:$0xff]
    %v54 = vld [vmem:[%s1 + $0xc8] sm:$0xff]
    %v55 = vld [vmem:[%s1 + $0xd0] sm:$0xff]
    %v56 = vld [vmem:[%s1 + $0xd8] sm:$0xff]
    %v57 = vld [vmem:[%s1 + $0xe0] sm:$0xff]
    %v58 = vld [vmem:[%s1 + $0xe8] sm:$0xff]
    %v59 = vld [vmem:[%s1 + $0xf0] sm:$0xff]
    %v60 = vld [vmem:[%s1 + $0xf8] sm:$0xff]
    %v61 = vld [vmem:[%s1 + $0x100] sm:$0xff]
    %v62 = vld [vmem:[%s1 + $0x108] sm:$0xff]
    %v63 = vld [vmem:[%s1 + $0x110] sm:$0xff]
    %v64 = vld [vmem:[%s1 + $0x118] sm:$0xff]
    %v65 = vld [vmem:[%s1 + $0x120] sm:$0xff]
    %v66 = vld [vmem:[%s1 + $0x128] sm:$0xff]
    %v67 = vld [vmem:[%s1 + $0x130] sm:$0xff]
    %v68 = vld [vmem:[%s1 + $0x138] sm:$0xff]
    %v69 = vld [vmem:[%s1 + $0x140] sm:$0xff]
    %v70 = vld [vmem:[%s1 + $0x148] sm:$0xff]
    %v71 = vld [vmem:[%s1 + $0x150] sm:$0xff]
    %v72 = vld [vmem:[%s1 + $0x158] sm:$0xff]
    %v73 = vld [vmem:[%s1 + $0x160] sm:$0xff]
    %v74 = vld [vmem:[%s1 + $0x168] sm:$0xff]
    %v75 = vld [vmem:[%s1 + $0x170] sm:$0xff]
    %v76 = vld [vmem:[%s1 + $0x178] sm:$0xff]
    %v77 = vld [vmem:[%s1 + $0x180] sm:$0xff]
    %v78 = vld [vmem:[%s1 + $0x188] sm:$0xff]
    %v79 = vld [vmem:[%s1 + $0x190] sm:$0xff]
    %v80 = vld [vmem:[%s1 + $0x198] sm:$0xff]
    %v81 = vld [vmem:[%s1 + $0x1a0] sm:$0xff]
    %v82 = vld [vmem:[%s1 + $0x1a8] sm:$0xff]
    %v83 = vld [vmem:[%s1 + $0x1b0] sm:$0xff]
    %v84 = vld [vmem:[%s1 + $0x1b8] sm:$0xff]
    %v85 = vld [vmem:[%s1 + $0x1c0] sm:$0xff]
    %v86 = vld [vmem:[%s1 + $0x1c8] sm:$0xff]
    %v87 = vld [vmem:[%s1 + $0x1d0] sm:$0xff]
    %v88 = vld [vmem:[%s1 + $0x1d8] sm:$0xff]
    %v89 = vld [vmem:[%s1 + $0x1e0] sm:$0xff]
    %v90 = vld [vmem:[%s1 + $0x1e8] sm:$0xff]
    %v91 = vld [vmem:[%s1 + $0x1f0] sm:$0xff]
    %v92 = vld [vmem:[%s1 + $0x1f8] sm:$0xff]
    %v93 = vld [vmem:[%s1 + $0x200] sm:$0xff]
    %v94 = vld [vmem:[%s1 + $0x208] sm:$0xff]
    %v95 = vld [vmem:[%s1 + $0x210] sm:$0xff]
    %v96 = vld [vmem:[%s1 + $0x218] sm:$0xff]
    %v97 = vld [vmem:[%s1 + $0x220] sm:$0xff]
    %v98 = vld [vmem:[%s1 + $0x228] sm:$0xff]
    %v99 = vld [vmem:[%s1 + $0x230] sm:$0xff]
    %v100 = vld [vmem:[%s1 + $0x238] sm:$0xff]
    %v101 = vld [vmem:[%s1 + $0x240] sm:$0xff]
    %v102 = vld [vmem:[%s1 + $0x248] sm:$0xff]
    %v103 = vld [vmem:[%s1 + $0x250] sm:$0xff]
    %v104 = vld [vmem:[%s1 + $0x258] sm:$0xff]
    %v105 = vld [vmem:[%s1 + $0x260] sm:$0xff]
    %v106 = vld [vmem:[%s1 + $0x268] sm:$0xff]
    %v107 = vld [vmem:[%s1 + $0x270] sm:$0xff]
    %v108 = vld [vmem:[%s1 + $0x278] sm:$0xff]
    %v109 = vld [vmem:[%s1 + $0x280] sm:$0xff]
    %v110 = vld [vmem:[%s1 + $0x288] sm:$0xff]
    %v111 = vld [vmem:[%s1 + $0x290] sm:$0xff]
    %v112 = vld [vmem:[%s1 + $0x298] sm:$0xff]
    %v113 = vld [vmem:[%s1 + $0x2a0] sm:$0xff]
    %v114 = vld [vmem:[%s1 + $0x2a8] sm:$0xff]
    %v115 = vld [vmem:[%s1 + $0x2b0] sm:$0xff]
    %v116 = vld [vmem:[%s1 + $0x2b8] sm:$0xff]
    %v117 = vld [vmem:[%s1 + $0x2c0] sm:$0xff]
    %v118 = vld [vmem:[%s1 + $0x2c8] sm:$0xff]
    %v119 = vld [vmem:[%s1 + $0x2d0] sm:$0xff]
    %v120 = vld [vmem:[%s1 + $0x2d8] sm:$0xff]
    %v121 = vld [vmem:[%s1 + $0x2e0] sm:$0xff]
    %v122 = vld [vmem:[%s1 + $0x2e8] sm:$0xff]
    %v123 = vld [vmem:[%s1 + $0x2f0] sm:$0xff]
    %v124 = vld [vmem:[%s1 + $0x2f8] sm:$0xff]
    %v125 = vld [vmem:[%s1 + $0x300] sm:$0xff]
    %v126 = vld [vmem:[%s1 + $0x308] sm:$0xff]
    %v127 = vld [vmem:[%s2] sm:$0x1]
    %v129 = vlaneseq
    %v130 = vshrl.u32 %v129, 7
    %v131 = vsub.s32 0, %v130
    %v132 = vrot.slane %v127, %v131
    %vm134 = vcmask 130048
    %v136 = vsel %vm134, %v21, 0
    %v139 = vsel %vm134, %v28, 0
    %141 = vmatprep.subr.mxu0 0.0
    %142 = vmatpush1.msra.mxu0 %v44
    %143 = vmatprep.subr.mxu0 0.0
    %144 = vmatpush1.msra.mxu0 %v43
    %145 = vmatprep.subr.mxu0 0.0
    %146 = vmatpush1.msra.mxu0 %v42
    %147 = vmatprep.subr.mxu0 0.0
    %148 = vmatpush1.msra.mxu0 %v41
    %149 = vmatprep.subr.mxu0 0.0
    %150 = vmatpush1.msra.mxu0 %v40
    %151 = vmatprep.subr.mxu0 0.0
    %152 = vmatpush1.msra.mxu0 %v39
    %153 = vmatprep.subr.mxu0 0.0
    %154 = vmatpush1.msra.mxu0 %v38
    %155 = vmatprep.subr.mxu0 0.0
    %156 = vmatpush1.msra.mxu0 %v37
    %157 = vmatprep.subr.mxu0 0.0
    %158 = vmatpush1.msra.mxu0 %v36
    %159 = vmatprep.subr.mxu0 0.0
    %160 = vmatpush1.msra.mxu0 %v35
    %161 = vmatprep.subr.mxu0 0.0
    %162 = vmatpush1.msra.mxu0 %v34
    %163 = vmatprep.subr.mxu0 0.0
    %164 = vmatpush1.msra.mxu0 %v33
    %165 = vmatprep.subr.mxu0 0.0
    %166 = vmatpush1.msra.mxu0 %v32
    %167 = vmatprep.subr.mxu0 0.0
    %168 = vmatpush1.msra.mxu0 %v31
    %169 = vmatprep.subr.mxu0 0.0
    %170 = vmatpush1.msra.mxu0 %v30
    %171 = vmatprep.subr.mxu0 0.0
    %172 = vmatpush1.msra.mxu0 %v29
    %173 = vmatprep.subr.mxu0 0.0
    %174 = vmatpush2.msra.mxu0 %v60
    %175 = vmatprep.subr.mxu0 0.0
    %176 = vmatpush2.msra.mxu0 %v59
    %177 = vmatprep.subr.mxu0 0.0
    %178 = vmatpush2.msra.mxu0 %v58
    %179 = vmatprep.subr.mxu0 0.0
    %180 = vmatpush2.msra.mxu0 %v57
    %181 = vmatprep.subr.mxu0 0.0
    %182 = vmatpush2.msra.mxu0 %v56
    %183 = vmatprep.subr.mxu0 0.0
    %184 = vmatpush2.msra.mxu0 %v55
    %185 = vmatprep.subr.mxu0 0.0
    %186 = vmatpush2.msra.mxu0 %v54
    %187 = vmatprep.subr.mxu0 0.0
    %188 = vmatpush2.msra.mxu0 %v53
    %189 = vmatprep.subr.mxu0 0.0
    %190 = vmatpush2.msra.mxu0 %v52
    %191 = vmatprep.subr.mxu0 0.0
    %192 = vmatpush2.msra.mxu0 %v51
    %193 = vmatprep.subr.mxu0 0.0
    %194 = vmatpush2.msra.mxu0 %v50
    %195 = vmatprep.subr.mxu0 0.0
    %196 = vmatpush2.msra.mxu0 %v49
    %197 = vmatprep.subr.mxu0 0.0
    %198 = vmatpush2.msra.mxu0 %v48
    %199 = vmatprep.subr.mxu0 0.0
    %200 = vmatpush2.msra.mxu0 %v47
    %201 = vmatprep.subr.mxu0 0.0
    %202 = vmatpush2.msra.mxu0 %v46
    %203 = vmatprep.subr.mxu0 0.0
    %204 = vmatpush2.msra.mxu0 %v45
    %205 = vmatprep.mubr.f32.mxu0 %v16
    %206 = vmatmul.mubr.f32.gmra.mxu0 %v15
    %v207 = vpop.f32.mrf.mxu0
    %v208 = vadd.f32 %v132, %v207
    %v209 = vpop.f32.mrf.mxu0
    %210 = vmatprep.mubr.f32.mxu0 %v23
    %211 = vmatmul.mubr.f32.gmra.mxu0 %v22
    %v212 = vpop.f32.mrf.mxu0
    %v213 = vadd.f32 %v132, %v212
    %v214 = vpop.f32.mrf.mxu0
    %215 = vdwg.mxu0
    %216 = vmatprep.subr.mxu0 0.0
    %217 = vmatpush1.msra.mxu0 %v76
    %218 = vmatprep.subr.mxu0 0.0
    %219 = vmatpush1.msra.mxu0 %v75
    %220 = vmatprep.subr.mxu0 0.0
    %221 = vmatpush1.msra.mxu0 %v74
    %222 = vmatprep.subr.mxu0 0.0
    %223 = vmatpush1.msra.mxu0 %v73
    %224 = vmatprep.subr.mxu0 0.0
    %225 = vmatpush1.msra.mxu0 %v72
    %226 = vmatprep.subr.mxu0 0.0
    %227 = vmatpush1.msra.mxu0 %v71
    %228 = vmatprep.subr.mxu0 0.0
    %229 = vmatpush1.msra.mxu0 %v70
    %230 = vmatprep.subr.mxu0 0.0
    %231 = vmatpush1.msra.mxu0 %v69
    %232 = vmatprep.subr.mxu0 0.0
    %233 = vmatpush1.msra.mxu0 %v68
    %234 = vmatprep.subr.mxu0 0.0
    %235 = vmatpush1.msra.mxu0 %v67
    %236 = vmatprep.subr.mxu0 0.0
    %237 = vmatpush1.msra.mxu0 %v66
    %238 = vmatprep.subr.mxu0 0.0
    %239 = vmatpush1.msra.mxu0 %v65
    %240 = vmatprep.subr.mxu0 0.0
    %241 = vmatpush1.msra.mxu0 %v64
    %242 = vmatprep.subr.mxu0 0.0
    %243 = vmatpush1.msra.mxu0 %v63
    %244 = vmatprep.subr.mxu0 0.0
    %245 = vmatpush1.msra.mxu0 %v62
    %246 = vmatprep.subr.mxu0 0.0
    %247 = vmatpush1.msra.mxu0 %v61
    %248 = vmatprep.subr.mxu0 0.0
    %249 = vmatpush2.msra.mxu0 %v92
    %250 = vmatprep.subr.mxu0 0.0
    %251 = vmatpush2.msra.mxu0 %v91
    %252 = vmatprep.subr.mxu0 0.0
    %253 = vmatpush2.msra.mxu0 %v90
    %254 = vmatprep.subr.mxu0 0.0
    %255 = vmatpush2.msra.mxu0 %v89
    %256 = vmatprep.subr.mxu0 0.0
    %257 = vmatpush2.msra.mxu0 %v88
    %258 = vmatprep.subr.mxu0 0.0
    %259 = vmatpush2.msra.mxu0 %v87
    %260 = vmatprep.subr.mxu0 0.0
    %261 = vmatpush2.msra.mxu0 %v86
    %262 = vmatprep.subr.mxu0 0.0
    %263 = vmatpush2.msra.mxu0 %v85
    %264 = vmatprep.subr.mxu0 0.0
    %265 = vmatpush2.msra.mxu0 %v84
    %266 = vmatprep.subr.mxu0 0.0
    %267 = vmatpush2.msra.mxu0 %v83
    %268 = vmatprep.subr.mxu0 0.0
    %269 = vmatpush2.msra.mxu0 %v82
    %270 = vmatprep.subr.mxu0 0.0
    %271 = vmatpush2.msra.mxu0 %v81
    %272 = vmatprep.subr.mxu0 0.0
    %273 = vmatpush2.msra.mxu0 %v80
    %274 = vmatprep.subr.mxu0 0.0
    %275 = vmatpush2.msra.mxu0 %v79
    %276 = vmatprep.subr.mxu0 0.0
    %277 = vmatpush2.msra.mxu0 %v78
    %278 = vmatprep.subr.mxu0 0.0
    %279 = vmatpush2.msra.mxu0 %v77
    %280 = vmatprep.mubr.f32.mxu0 %v18
    %281 = vmatmul.mubr.f32.gmra.mxu0 %v17
    %v282 = vpop.f32.mrf.mxu0
    %v283 = vadd.f32 %v208, %v282
    %v284 = vpop.f32.mrf.mxu0
    %285 = vmatprep.mubr.f32.mxu0 %v25
    %286 = vmatmul.mubr.f32.gmra.mxu0 %v24
    %v287 = vpop.f32.mrf.mxu0
    %v288 = vadd.f32 %v213, %v287
    %v289 = vpop.f32.mrf.mxu0
    %290 = vdwg.mxu0
    %291 = vmatprep.subr.mxu0 0.0
    %292 = vmatpush1.msra.mxu0 %v108
    %293 = vmatprep.subr.mxu0 0.0
    %294 = vmatpush1.msra.mxu0 %v107
    %295 = vmatprep.subr.mxu0 0.0
    %296 = vmatpush1.msra.mxu0 %v106
    %297 = vmatprep.subr.mxu0 0.0
    %298 = vmatpush1.msra.mxu0 %v105
    %299 = vmatprep.subr.mxu0 0.0
    %300 = vmatpush1.msra.mxu0 %v104
    %301 = vmatprep.subr.mxu0 0.0
    %302 = vmatpush1.msra.mxu0 %v103
    %303 = vmatprep.subr.mxu0 0.0
    %304 = vmatpush1.msra.mxu0 %v102
    %305 = vmatprep.subr.mxu0 0.0
    %306 = vmatpush1.msra.mxu0 %v101
    %307 = vmatprep.subr.mxu0 0.0
    %308 = vmatpush1.msra.mxu0 %v100
    %309 = vmatprep.subr.mxu0 0.0
    %310 = vmatpush1.msra.mxu0 %v99
    %311 = vmatprep.subr.mxu0 0.0
    %312 = vmatpush1.msra.mxu0 %v98
    %313 = vmatprep.subr.mxu0 0.0
    %314 = vmatpush1.msra.mxu0 %v97
    %315 = vmatprep.subr.mxu0 0.0
    %316 = vmatpush1.msra.mxu0 %v96
    %317 = vmatprep.subr.mxu0 0.0
    %318 = vmatpush1.msra.mxu0 %v95
    %319 = vmatprep.subr.mxu0 0.0
    %320 = vmatpush1.msra.mxu0 %v94
    %321 = vmatprep.subr.mxu0 0.0
    %322 = vmatpush1.msra.mxu0 %v93
    %323 = vmatprep.subr.mxu0 0.0
    %324 = vmatpush2.msra.mxu0 %v124
    %325 = vmatprep.subr.mxu0 0.0
    %326 = vmatpush2.msra.mxu0 %v123
    %327 = vmatprep.subr.mxu0 0.0
    %328 = vmatpush2.msra.mxu0 %v122
    %329 = vmatprep.subr.mxu0 0.0
    %330 = vmatpush2.msra.mxu0 %v121
    %331 = vmatprep.subr.mxu0 0.0
    %332 = vmatpush2.msra.mxu0 %v120
    %333 = vmatprep.subr.mxu0 0.0
    %334 = vmatpush2.msra.mxu0 %v119
    %335 = vmatprep.subr.mxu0 0.0
    %336 = vmatpush2.msra.mxu0 %v118
    %337 = vmatprep.subr.mxu0 0.0
    %338 = vmatpush2.msra.mxu0 %v117
    %339 = vmatprep.subr.mxu0 0.0
    %340 = vmatpush2.msra.mxu0 %v116
    %341 = vmatprep.subr.mxu0 0.0
    %342 = vmatpush2.msra.mxu0 %v115
    %343 = vmatprep.subr.mxu0 0.0
    %344 = vmatpush2.msra.mxu0 %v114
    %345 = vmatprep.subr.mxu0 0.0
    %346 = vmatpush2.msra.mxu0 %v113
    %347 = vmatprep.subr.mxu0 0.0
    %348 = vmatpush2.msra.mxu0 %v112
    %349 = vmatprep.subr.mxu0 0.0
    %350 = vmatpush2.msra.mxu0 %v111
    %351 = vmatprep.subr.mxu0 0.0
    %352 = vmatpush2.msra.mxu0 %v110
    %353 = vmatprep.subr.mxu0 0.0
    %354 = vmatpush2.msra.mxu0 %v109
    %355 = vmatprep.mubr.f32.mxu0 %v20
    %356 = vmatmul.mubr.f32.gmra.mxu0 %v19
    %v357 = vpop.f32.mrf.mxu0
    %v358 = vadd.f32 %v283, %v357
    %v359 = vpop.f32.mrf.mxu0
    %360 = vmatprep.mubr.f32.mxu0 %v27
    %361 = vmatmul.mubr.f32.gmra.mxu0 %v26
    %v362 = vpop.f32.mrf.mxu0
    %v363 = vadd.f32 %v288, %v362
    %v364 = vpop.f32.mrf.mxu0
    %365 = vdwg.mxu0
    %366 = vmatprep.subr.mxu0 0.0
    %367 = vmatpush1.msra.mxu0 0.0
    %368 = vmatprep.subr.mxu0 0.0
    %369 = vmatpush1.msra.mxu0 0.0
    %370 = vmatprep.subr.mxu0 0.0
    %371 = vmatpush1.msra.mxu0 0.0
    %372 = vmatprep.subr.mxu0 0.0
    %373 = vmatpush1.msra.mxu0 0.0
    %374 = vmatprep.subr.mxu0 0.0
    %375 = vmatpush1.msra.mxu0 0.0
    %376 = vmatprep.subr.mxu0 0.0
    %377 = vmatpush1.msra.mxu0 0.0
    %378 = vmatprep.subr.mxu0 0.0
    %379 = vmatpush1.msra.mxu0 0.0
    %380 = vmatprep.subr.mxu0 0.0
    %381 = vmatpush1.msra.mxu0 0.0
    %382 = vmatprep.subr.mxu0 0.0
    %383 = vmatpush1.msra.mxu0 0.0
    %384 = vmatprep.subr.mxu0 0.0
    %385 = vmatpush1.msra.mxu0 0.0
    %386 = vmatprep.subr.mxu0 0.0
    %387 = vmatpush1.msra.mxu0 0.0
    %388 = vmatprep.subr.mxu0 0.0
    %389 = vmatpush1.msra.mxu0 0.0
    %390 = vmatprep.subr.mxu0 0.0
    %391 = vmatpush1.msra.mxu0 0.0
    %392 = vmatprep.subr.mxu0 0.0
    %393 = vmatpush1.msra.mxu0 0.0
    %394 = vmatprep.subr.mxu0 0.0
    %395 = vmatpush1.msra.mxu0 %v126
    %396 = vmatprep.subr.mxu0 0.0
    %397 = vmatpush1.msra.mxu0 %v125
    %398 = vmatprep.subr.mxu0 0.0
    %399 = vmatpush2.msra.mxu0 0.0
    %400 = vmatprep.subr.mxu0 0.0
    %401 = vmatpush2.msra.mxu0 0.0
    %402 = vmatprep.subr.mxu0 0.0
    %403 = vmatpush2.msra.mxu0 0.0
    %404 = vmatprep.subr.mxu0 0.0
    %405 = vmatpush2.msra.mxu0 0.0
    %406 = vmatprep.subr.mxu0 0.0
    %407 = vmatpush2.msra.mxu0 0.0
    %408 = vmatprep.subr.mxu0 0.0
    %409 = vmatpush2.msra.mxu0 0.0
    %410 = vmatprep.subr.mxu0 0.0
    %411 = vmatpush2.msra.mxu0 0.0
    %412 = vmatprep.subr.mxu0 0.0
    %413 = vmatpush2.msra.mxu0 0.0
    %414 = vmatprep.subr.mxu0 0.0
    %415 = vmatpush2.msra.mxu0 0.0
    %416 = vmatprep.subr.mxu0 0.0
    %417 = vmatpush2.msra.mxu0 0.0
    %418 = vmatprep.subr.mxu0 0.0
    %419 = vmatpush2.msra.mxu0 0.0
    %420 = vmatprep.subr.mxu0 0.0
    %421 = vmatpush2.msra.mxu0 0.0
    %422 = vmatprep.subr.mxu0 0.0
    %423 = vmatpush2.msra.mxu0 0.0
    %424 = vmatprep.subr.mxu0 0.0
    %425 = vmatpush2.msra.mxu0 0.0
    %426 = vmatprep.subr.mxu0 0.0
    %427 = vmatpush2.msra.mxu0 0.0
    %428 = vmatprep.subr.mxu0 0.0
    %429 = vmatpush2.msra.mxu0 0.0
    %430 = vmatprep.mubr.f32.mxu0 0.0
    %431 = vmatmul.mubr.f32.gmra.mxu0 %v136
    %v432 = vpop.f32.mrf.mxu0
    %v433 = vadd.f32 %v358, %v432
    %v434 = vpop.f32.mrf.mxu0
    %435 = vmatprep.mubr.f32.mxu0 0.0
    %436 = vmatmul.mubr.f32.gmra.mxu0 %v139
    %v437 = vpop.f32.mrf.mxu0
    %v438 = vadd.f32 %v363, %v437
    %v439 = vpop.f32.mrf.mxu0
    %440 = vdwg.mxu0
    %vm441 = vcmask 80896
    %442 = vst.msk [vmem:[#allocation2] sm:$0xff] %vm441, %v433
    %443 = vst.msk [vmem:[#allocation2 + $0x8] sm:$0xff] %vm441, %v438
    // Predicated region
    $region14: #{tpu_custom_call.1} parent=1 // pred_check
      _
    $region15: #{tpu_custom_call.1} parent=1 // pred_check_branch
      %445 = sbr.rel (0) target = $region17
    $region16: #{tpu_custom_call.1} parent=1 // pred_region
      %s447 = ssub.s32 256, 256
      %448 = vsyncadd [#allocation3], %s447
      %s449 = sshll.u32 [#allocation2], 4
      %s450 = int_to_ptr.vmem [resolvable:$true] %s449
      %455 = dma.vmem_to_hbm [thread:$0]  %s450, 256, %s3, [#allocation3], 128, 128, 8
    $region17: #{tpu_custom_call.1} parent=1 // pred_fallthru
      _
    // Predicated region
    $region18: #{tpu_custom_call.1} parent=1 // pred_check
      _
    $region19: #{tpu_custom_call.1} parent=1 // pred_check_branch
      %457 = sbr.rel (0) target = $region21
    $region20: #{tpu_custom_call.1} parent=1 // pred_region
      %458 = dma.done [#allocation3], 256
    $region21: #{tpu_custom_call.1} parent=1 // pred_fallthru
      _
    %459 = vsyncpa [#allocation3], 1

</llo_original>
